<compile_context>
chip_gen: v6e
topology: v6e:2x2x1
jax: 0.10.0
libtpu: 0.0.40
codegen_flags: <defaults>
</compile_context>

<pallas_src>
import functools

import jax
import jax.numpy as jnp
from jax import lax
from jax.experimental import pallas as pl
from jax.experimental.pallas import tpu as pltpu


# ----------------------------------------------------------------------------
# helpers: pick lane width / block sizes
# ----------------------------------------------------------------------------
def _pick_lanes(n_pad):
    for lanes in (2048, 1024, 512, 256, 128):
        if n_pad % lanes == 0:
            return lanes
    return 128  # unreachable: n_pad is always a multiple of 128


def _pick_block_rows(rows, lanes):
    # Target <= ~2 MiB per f32 stream so that 3 streams x 2 pipeline buffers
    # stay well under the 16 MiB scoped-VMEM default of v5e (and v6e/v7x).
    max_rows = max(8, (((2 << 20) // (lanes * 4)) // 8) * 8)
    return rows if rows <= max_rows else max_rows


# ----------------------------------------------------------------------------
# Kernel 1: fused MSE loss + input-jacobian.  Row-tiled over a lane-dense
# (rows, lanes) view; each grid step streams its grad tile out and writes a
# (1, lanes) partial squared-diff sum (sublane reduce only).  Grid axis is
# "parallel" so v7x can shard it across both TensorCores.
# ----------------------------------------------------------------------------
def _loss_grad_kernel(x_ref, t_ref, grad_ref, psum_ref, *, two_inv_n):
    diff = x_ref[...].astype(jnp.float32) - t_ref[...].astype(jnp.float32)
    grad_ref[...] = (two_inv_n * diff).astype(grad_ref.dtype)
    psum_ref[...] = jnp.sum(diff * diff, axis=0, keepdims=True)


def _mse_loss_and_jacobian_impl(x, target):
    orig_shape = x.shape
    n = x.size
    n_pad = ((n + 127) // 128) * 128
    lanes = _pick_lanes(n_pad)
    rows = n_pad // lanes
    blk_rows = _pick_block_rows(rows, lanes)
    num_blocks = pl.cdiv(rows, blk_rows)
    rows_pad = num_blocks * blk_rows
    total_pad = rows_pad * lanes

    xf = x.reshape(-1)
    tf = target.reshape(-1)
    if total_pad != n:
        xf = jnp.pad(xf, (0, total_pad - n))      # zeros: no effect on loss/grad
        tf = jnp.pad(tf, (0, total_pad - n))
    x2d = xf.reshape(rows_pad, lanes)
    t2d = tf.reshape(rows_pad, lanes)

    kernel = functools.partial(_loss_grad_kernel, two_inv_n=2.0 / n)
    grad2d, psum = pl.pallas_call(
        kernel,
        out_shape=(
            jax.ShapeDtypeStruct((rows_pad, lanes), x.dtype),
            jax.ShapeDtypeStruct((num_blocks, lanes), jnp.float32),
        ),
        grid=(num_blocks,),
        in_specs=[
            pl.BlockSpec((blk_rows, lanes), lambda i: (i, 0)),
            pl.BlockSpec((blk_rows, lanes), lambda i: (i, 0)),
        ],
        out_specs=(
            pl.BlockSpec((blk_rows, lanes), lambda i: (i, 0)),
            pl.BlockSpec((1, lanes), lambda i: (i, 0)),
        ),
        compiler_params=pltpu.CompilerParams(
            dimension_semantics=("parallel",),
            vmem_limit_bytes=32 << 20),
    )(x2d, t2d)

    loss = jnp.sum(psum) / n                      # tiny final reduce in XLA
    grad_flat = grad2d.reshape(-1)
    if total_pad != n:
        grad_flat = grad_flat[:n]
    dLdx = grad_flat.reshape(orig_shape)
    return loss, dLdx


_mse_loss_and_jacobian = jax.jit(_mse_loss_and_jacobian_impl)


# ----------------------------------------------------------------------------
# Kernel 2: input Hessian of the MSE loss = (2/N) * I_N, built as 1024x1024
# blocks directly into the (N, N) output (cdiv grid; edge blocks clipped by
# Pallas, so no padded buffer and no post-kernel slice copy).  Off-diagonal
# blocks are pure zero-stores; only diagonal blocks build iotas.
# ----------------------------------------------------------------------------
def _hessian_kernel(o_ref, *, blk, diag_val):
    i = pl.program_id(0)
    j = pl.program_id(1)

    @pl.when(i != j)
    def _():
        o_ref[...] = jnp.zeros_like(o_ref)

    @pl.when(i == j)
    def _():
        r = lax.broadcasted_iota(jnp.int32, (blk, blk), 0)
        c = lax.broadcasted_iota(jnp.int32, (blk, blk), 1)
        o_ref[...] = jnp.where(r == c, diag_val, 0.0).astype(o_ref.dtype)


def _build_mse_hessian(n, dtype):
    blk = min(1024, ((max(n, 1) + 127) // 128) * 128)
    nb = pl.cdiv(n, blk)
    kernel = functools.partial(_hessian_kernel, blk=blk, diag_val=2.0 / n)
    return pl.pallas_call(
        kernel,
        out_shape=jax.ShapeDtypeStruct((n, n), dtype),
        grid=(nb, nb),
        out_specs=pl.BlockSpec((blk, blk), lambda i, j: (i, j)),
        compiler_params=pltpu.CompilerParams(
            dimension_semantics=("parallel", "parallel"),
            vmem_limit_bytes=32 << 20),
    )()


# Python-side cache: the Hessian is data-independent, so materialize it at most
# once per (shape, dtype) — mirrors the torch module caching it on `self`.
_HESSIAN_CACHE = {}


def _mse_loss_hessian_cached(orig_shape, dtype):
    key = (tuple(int(s) for s in orig_shape), jnp.dtype(dtype).name)
    h = _HESSIAN_CACHE.get(key)
    if h is None:
        n = 1
        for s in orig_shape:
            n *= int(s)
        h = _build_mse_hessian(n, dtype).reshape(orig_shape + orig_shape)
        _HESSIAN_CACHE[key] = h
    return h


# ----------------------------------------------------------------------------
# O2Loss.forward equivalent
# ----------------------------------------------------------------------------
def o2loss_forward(x, target):
    """Pallas equivalent of O2Loss(nn.MSELoss()).forward: returns
    (loss, dLdx, dL2dx2); in the torch module `loss` is the return value and
    dLdx / dL2dx2 are the cached side outputs."""
    assert x.shape == target.shape
    loss, dLdx = _mse_loss_and_jacobian(x, target)
    dL2dx2 = _mse_loss_hessian_cached(x.shape, x.dtype)
    # TODO(synk): get_loss_input_hessian_cached's SparseSymmetricMatrix
    # conversion is a CPU-side sparse repack with no Pallas equivalent.
    return loss, dLdx, dL2dx2


if __name__ == "__main__":
    # Small NCHW shape consistent with a conv-net input: batch=2, channels=4, 16x16 spatial.
    key = jax.random.PRNGKey(0)
    kx, kt = jax.random.split(key)
    shape = (2, 4, 16, 16)                     # N = 2048
    x = jax.random.normal(kx, shape, dtype=jnp.float32)
    target = jax.random.normal(kt, shape, dtype=jnp.float32)

    loss, dLdx, dL2dx2 = o2loss_forward(x, target)
    jax.block_until_ready((loss, dLdx, dL2dx2))

    # Light correctness checks against pure-JAX reference.
    n = x.size
    loss_ref = jnp.mean((x - target) ** 2)
    dLdx_ref = 2.0 * (x - target) / n
    assert jnp.allclose(loss, loss_ref, rtol=1e-5, atol=1e-6)
    assert jnp.allclose(dLdx, dLdx_ref, rtol=1e-5, atol=1e-6)
    hess_flat = dL2dx2.reshape(n, n)
    assert jnp.allclose(hess_flat, (2.0 / n) * jnp.eye(n, dtype=jnp.float32),
                        rtol=1e-5, atol=1e-7)

    # Second call must reuse the cached Hessian (no re-materialization).
    _, _, dL2dx2_again = o2loss_forward(x, target)
    assert dL2dx2_again is dL2dx2

    print("KERNEL_OK")
</pallas_src>

<mosaic_0001>
module attributes {stable_mosaic.version = 11 : i64} {
  func.func @_loss_grad_kernel(%arg0: i32, %arg1: memref<1x2048xf32, #tpu.memory_space<vmem>>, %arg2: memref<1x2048xf32, #tpu.memory_space<vmem>>, %arg3: memref<1x2048xf32, #tpu.memory_space<vmem>>, %arg4: memref<1x2048xf32, #tpu.memory_space<vmem>>) attributes {dimension_semantics = [#tpu.dimension_semantics<parallel>], iteration_bounds = array<i64: 1>, scalar_prefetch = 0 : i64, scratch_operands = 0 : i64, tpu.core_type = #tpu.core_type<tc>, window_params = [{transform_indices = @transform_0, window_bounds = array<i64: 1, 2048>}, {transform_indices = @transform_1, window_bounds = array<i64: 1, 2048>}, {transform_indices = @transform_2, window_bounds = array<i64: 1, 2048>}, {transform_indices = @transform_3, window_bounds = array<i64: 1, 2048>}]} {
    %c0 = arith.constant 0 : index
    %c0_0 = arith.constant 0 : index
    %0 = vector.load %arg1[%c0, %c0_0] : memref<1x2048xf32, #tpu.memory_space<vmem>>, vector<1x2048xf32>
    %c0_1 = arith.constant 0 : index
    %c0_2 = arith.constant 0 : index
    %1 = vector.load %arg2[%c0_1, %c0_2] : memref<1x2048xf32, #tpu.memory_space<vmem>>, vector<1x2048xf32>
    %2 = arith.subf %0, %1 : vector<1x2048xf32>
    %cst = arith.constant 9.765625E-4 : f32
    %3 = vector.broadcast %cst : f32 to vector<1x2048xf32>
    %4 = arith.mulf %3, %2 : vector<1x2048xf32>
    %c0_3 = arith.constant 0 : index
    %c0_4 = arith.constant 0 : index
    %5 = vector.load %arg3[%c0_3, %c0_4] : memref<1x2048xf32, #tpu.memory_space<vmem>>, vector<1x2048xf32>
    tpu.vector_store %arg3[%c0_3, %c0_4], %4 {strides = array<i32>} : memref<1x2048xf32, #tpu.memory_space<vmem>>, vector<1x2048xf32>,
    %6 = arith.mulf %2, %2 : vector<1x2048xf32>
    %cst_5 = arith.constant dense<0.000000e+00> : vector<2048xf32>
    %7 = vector.multi_reduction <add>, %6, %cst_5 [0] : vector<1x2048xf32> to vector<2048xf32>
    %8 = vector.shape_cast %7 : vector<2048xf32> to vector<1x2048xf32>
    %c0_6 = arith.constant 0 : index
    %c0_7 = arith.constant 0 : index
    %9 = vector.load %arg4[%c0_6, %c0_7] : memref<1x2048xf32, #tpu.memory_space<vmem>>, vector<1x2048xf32>
    tpu.vector_store %arg4[%c0_6, %c0_7], %8 {strides = array<i32>} : memref<1x2048xf32, #tpu.memory_space<vmem>>, vector<1x2048xf32>,
    return
  }
  func.func @transform_0(%arg0: i32) -> (i32, i32) {
    %c0_i32 = arith.constant 0 : i32
    %c0_i32_0 = arith.constant 0 : i32
    return %arg0, %c0_i32 : i32, i32
  }
  func.func @transform_1(%arg0: i32) -> (i32, i32) {
    %c0_i32 = arith.constant 0 : i32
    %c0_i32_0 = arith.constant 0 : i32
    return %arg0, %c0_i32 : i32, i32
  }
  func.func @transform_2(%arg0: i32) -> (i32, i32) {
    %c0_i32 = arith.constant 0 : i32
    %c0_i32_0 = arith.constant 0 : i32
    return %arg0, %c0_i32 : i32, i32
  }
  func.func @transform_3(%arg0: i32) -> (i32, i32) {
    %c0_i32 = arith.constant 0 : i32
    %c0_i32_0 = arith.constant 0 : i32
    return %arg0, %c0_i32 : i32, i32
  }
}

</mosaic_0001>

<llo_original>
// kernel: _mse_loss_and_jacobian_impl.1
$region0: #{_mse_loss_and_jacobian_impl.1}
  #allocation0 [shape = 'u32[]', space=smem, size = 0x4, offset = 0x4, fixed_abs, tag = 'smem constant byte address 0x4 - core index']
  #allocation1 [shape = 'u32[144,128]{1,0:T(1,128)}', space=vmem, size = 0x12000, scoped, tag = 'internal scratch']
  %s0 = inlined_call_operand.vmem [shape: f32[1,2048], index: 0, kind: input, shape index: {}]
  %s1 = inlined_call_operand.vmem [shape: f32[1,2048], index: 1, kind: input, shape index: {}]
  %s2 = inlined_call_operand.vmem [shape: f32[1,2048], index: 2, kind: output, shape index: {0}]
  %s3 = inlined_call_operand.vmem [shape: f32[1,2048], index: 3, kind: output, shape index: {1}]
  %4 = xla_tuple %s2, %s3
  %s5 = sld [smem:[#allocation0]]
  $region26: #{_mse_loss_and_jacobian_impl.1} parent=0
    _
  %s7 = ssub.s32 1, %s5
  %s8 = scalar_select 0, %s7, %s5
  // Predicated region
  $region2: #{_mse_loss_and_jacobian_impl.1} parent=0 // pred_check
    _
  $region3: #{_mse_loss_and_jacobian_impl.1} parent=0 // pred_check_branch
    %10 = sbr.rel (0) target = $region5
  $region4: #{_mse_loss_and_jacobian_impl.1} parent=0 // pred_region
    _
  $region5: #{_mse_loss_and_jacobian_impl.1} parent=0 // pred_fallthru
    _
  // Predicated region
  $region6: #{_mse_loss_and_jacobian_impl.1} parent=0 // pred_check
    _
  $region7: #{_mse_loss_and_jacobian_impl.1} parent=0 // pred_check_branch
    %12 = sbr.rel (0) target = $region9
  $region8: #{_mse_loss_and_jacobian_impl.1} parent=0 // pred_region
    _
  $region9: #{_mse_loss_and_jacobian_impl.1} parent=0 // pred_fallthru
    _
  %v13 = vld [vmem:[%s0] sm:$0xff]
  %v14 = vld [vmem:[%s0 + $0x8] sm:$0xff]
  %v15 = vld [vmem:[%s1] sm:$0xff]
  %v16 = vld [vmem:[%s1 + $0x8] sm:$0xff]
  %v17 = vsub.f32 %v13, %v15
  %v18 = vsub.f32 %v14, %v16
  %v19 = vmul.f32 %v17, 0.0009765625
  %v20 = vmul.f32 %v18, 0.0009765625
  %21 = vst [vmem:[%s2] sm:$0xff] %v19
  %22 = vst [vmem:[%s2 + $0x8] sm:$0xff] %v20
  %v23 = vmul.f32 %v17, %v17
  %v24 = vmul.f32 %v18, %v18
  %v25 = vadd.f32 %v23, 0.0
  %v26 = vadd.f32 %v24, 0.0
  %27 = vst [vmem:[%s3] sm:$0xff] %v25
  %28 = vst [vmem:[%s3 + $0x8] sm:$0xff] %v26
  // Predicated region
  $region10: #{_mse_loss_and_jacobian_impl.1} parent=0 // pred_check
    _
  $region11: #{_mse_loss_and_jacobian_impl.1} parent=0 // pred_check_branch
    %30 = sbr.rel (0) target = $region13
  $region12: #{_mse_loss_and_jacobian_impl.1} parent=0 // pred_region
    _
  $region13: #{_mse_loss_and_jacobian_impl.1} parent=0 // pred_fallthru
    _
  // Predicated region
  $region14: #{_mse_loss_and_jacobian_impl.1} parent=0 // pred_check
    _
  $region15: #{_mse_loss_and_jacobian_impl.1} parent=0 // pred_check_branch
    %32 = sbr.rel (0) target = $region17
  $region16: #{_mse_loss_and_jacobian_impl.1} parent=0 // pred_region
    _
  $region17: #{_mse_loss_and_jacobian_impl.1} parent=0 // pred_fallthru
    _
  // Predicated region
  $region18: #{_mse_loss_and_jacobian_impl.1} parent=0 // pred_check
    _
  $region19: #{_mse_loss_and_jacobian_impl.1} parent=0 // pred_check_branch
    %34 = sbr.rel (0) target = $region21
  $region20: #{_mse_loss_and_jacobian_impl.1} parent=0 // pred_region
    _
  $region21: #{_mse_loss_and_jacobian_impl.1} parent=0 // pred_fallthru
    _
  // Predicated region
  $region22: #{_mse_loss_and_jacobian_impl.1} parent=0 // pred_check
    _
  $region23: #{_mse_loss_and_jacobian_impl.1} parent=0 // pred_check_branch
    %36 = sbr.rel (0) target = $region25
  $region24: #{_mse_loss_and_jacobian_impl.1} parent=0 // pred_region
    _
  $region25: #{_mse_loss_and_jacobian_impl.1} parent=0 // pred_fallthru
    _

</llo_original>
